<compile_context>
chip_gen: v6e
topology: v6e:2x2x1
jax: 0.10.0
libtpu: 0.0.40
codegen_flags: <defaults>
</compile_context>

<pallas_src>
import functools

import jax
import jax.numpy as jnp
from jax import lax
from jax.experimental import pallas as pl
from jax.experimental.pallas import tpu as pltpu


# ---------------------------------------------------------------------------
# Kernels
# ---------------------------------------------------------------------------
def _pool_fc_kernel(x_ref, w_ref, b_ref, o_ref, acc_ref, *,
                    seq_len, exclude_cls, scale):
    """avg/sum pooling + FC.

    Grid: (batch_tiles, seq_tiles), reduction (seq) axis last.
    x_ref: (TB, TS, D)   w_ref: (D, Cp)   b_ref: (1, Cp) f32
    o_ref: (TB, Cp)      acc_ref: (TB, D) f32 pooled-sum accumulator
    """
    s = pl.program_id(1)
    ts = x_ref.shape[1]
    has_tail = (seq_len % ts) != 0          # static

    @pl.when(s == 0)
    def _init():
        acc_ref[...] = jnp.zeros_like(acc_ref)

    xb = x_ref[...]
    if has_tail:
        # Mask rows past the sequence end (partial last seq block) and, if
        # requested, the cls token at global index 0.  Elementwise select,
        # f32 accumulation.
        row = s * ts + lax.broadcasted_iota(jnp.int32, (1, ts, 1), 1)
        valid = row < seq_len
        if exclude_cls:
            valid = jnp.logical_and(valid, row > 0)
        xb = jnp.where(valid, xb, jnp.zeros_like(xb))
        acc_ref[...] += jnp.sum(xb, axis=1, dtype=jnp.float32)
    else:
        # Aligned full-block sum; subtract the cls row once (first seq block).
        acc_ref[...] += jnp.sum(xb, axis=1, dtype=jnp.float32)
        if exclude_cls:
            @pl.when(s == 0)
            def _drop_cls():
                acc_ref[...] -= x_ref[:, 0, :].astype(jnp.float32)

    @pl.when(s == pl.num_programs(1) - 1)
    def _finalize():
        pooled = acc_ref[...]
        if scale != 1.0:                    # 'avg' only
            pooled = pooled * jnp.float32(scale)
        # TODO(synk): dropout before the fc is a training-time op; identity here.
        # For bf16 inputs the f32 pooled sum is fed to the MXU in bf16 (f32
        # accumulation via preferred_element_type); the FC flops are tiny, so
        # the only precision loss is the bf16 rounding of pooled/W.
        y = jnp.dot(pooled.astype(w_ref.dtype), w_ref[...],
                    preferred_element_type=jnp.float32)
        y = y + b_ref[...]
        o_ref[...] = y.astype(o_ref.dtype)


def _cls_fc_kernel(x_ref, w_ref, b_ref, o_ref):
    """cls_token mode: x_ref already holds only the (TB, D) cls rows."""
    y = jnp.dot(x_ref[...].astype(w_ref.dtype), w_ref[...],
                preferred_element_type=jnp.float32)
    y = y + b_ref[...]
    o_ref[...] = y.astype(o_ref.dtype)


# ---------------------------------------------------------------------------
# Wrapper
# ---------------------------------------------------------------------------
def _round_up(v, m):
    return ((v + m - 1) // m) * m


def classification_head(x, w_t, b, *, patch_aggregation_method="avg",
                        cls_token_available=True,
                        vmem_budget_bytes=40 << 20):
    """Pallas TPU forward of ClassificationHead.

    x: (B, S, D); w_t: (D, C) (transposed nn.Linear weight); b: (C,).
    vmem_budget_bytes is the target *total* VMEM footprint (x tiles + resident
    weight/bias + output buffers + accumulator); the 40 MiB default (+margin)
    is safe on v5e/v6e (128 MiB physical) and v7x (64 MiB per TC).
    """
    B, S, D = x.shape
    Din, C = w_t.shape
    assert Din == D
    mode = patch_aggregation_method
    if mode not in ("avg", "sum", "cls_token"):
        raise ValueError(f"unsupported patch_aggregation_method: {mode!r}")
    if mode == "cls_token":
        assert cls_token_available
    if mode == "avg" and cls_token_available:
        assert S > 1, "avg pooling with a cls token needs at least 2 tokens"

    exclude_cls = cls_token_available and mode != "cls_token"
    if mode == "avg":
        scale = 1.0 / float(S - 1 if cls_token_available else S)
    else:
        scale = 1.0

    # Lane-dense padded class dim (unmasked stores, full MXU N tile).
    c_pad = max(128, _round_up(C, 128))
    # bf16 activations -> keep the resident weight in bf16 too (halves its
    # VMEM footprint, fast MXU path); otherwise leave the weight dtype alone.
    w_dtype = jnp.bfloat16 if x.dtype == jnp.bfloat16 else w_t.dtype
    w_p = jnp.zeros((D, c_pad), w_dtype).at[:, :C].set(w_t.astype(w_dtype))
    b_p = jnp.zeros((1, c_pad), jnp.float32).at[0, :C].set(b.astype(jnp.float32))

    x_item = jnp.dtype(x.dtype).itemsize
    out_item = jnp.dtype(x.dtype).itemsize
    w_item = jnp.dtype(w_dtype).itemsize

    # Resident (single-buffered) weight + bias.
    resident = D * c_pad * w_item + c_pad * 4
    avail = max(vmem_budget_bytes - resident, 64 << 10)

    # Keep >=2 batch grid steps when possible so v7x's two TCs split the work.
    megacore_cap = max(8, _round_up(pl.cdiv(B, 2), 8))

    if mode == "cls_token":
        # Only the CLS rows are read from HBM (S x less traffic than streaming
        # the whole sequence); the gather x[:, 0, :] is a tiny XLA slice.
        x_cls = x[:, 0, :]
        per_tb = 2 * D * x_item + 2 * c_pad * out_item
        tb = max(int(avail // per_tb), 1)
        if B > 8:
            tb = max(8, (min(tb, B, megacore_cap) // 8) * 8)
        else:
            tb = B
        footprint = resident + tb * per_tb
        vmem_limit = int(max(footprint + (4 << 20), 16 << 20))

        out = pl.pallas_call(
            _cls_fc_kernel,
            out_shape=jax.ShapeDtypeStruct((B, c_pad), x.dtype),
            grid=(pl.cdiv(B, tb),),
            in_specs=[
                pl.BlockSpec((tb, D), lambda i: (i, 0)),
                pl.BlockSpec((D, c_pad), lambda i: (0, 0),
                             pipeline_mode=pl.Buffered(1)),   # resident W
                pl.BlockSpec((1, c_pad), lambda i: (0, 0),
                             pipeline_mode=pl.Buffered(1)),   # resident b
            ],
            out_specs=pl.BlockSpec((tb, c_pad), lambda i: (i, 0)),
            compiler_params=pltpu.CompilerParams(
                dimension_semantics=("parallel",),
                vmem_limit_bytes=vmem_limit),
        )(x_cls, w_p, b_p)
        return out[:, :C]

    # --------------------------- avg / sum path ----------------------------
    def per_tb_bytes(ts):
        return (2 * ts * D * x_item       # double-buffered x tile
                + 2 * c_pad * out_item    # double-buffered output tile
                + D * 4)                  # f32 pooled-sum accumulator

    tb_min = 8 if B > 8 else B            # smallest legal (aligned) batch tile
    tb_fullseq = int(avail // per_tb_bytes(S))

    if tb_fullseq >= tb_min:
        # Whole sequence per grid step.
        ts = S
        if B > 8:
            tb = max(8, (min(tb_fullseq, B, megacore_cap) // 8) * 8)
        else:
            tb = B
    else:
        # Long sequence / large D: keep tb minimal and split S across a second
        # ("arbitrary") grid axis with a resident f32 accumulator.
        tb = tb_min
        x_budget = avail - tb * (2 * c_pad * out_item + D * 4)
        x_budget = max(x_budget, 2 * 8 * tb * D * x_item)
        ts = int(x_budget // (2 * tb * D * x_item))
        ts = min(max(8, (ts // 8) * 8), S)

    footprint = resident + tb * per_tb_bytes(ts)
    vmem_limit = int(max(footprint + (4 << 20), 16 << 20))

    kernel = functools.partial(_pool_fc_kernel, seq_len=S,
                               exclude_cls=exclude_cls, scale=scale)
    out = pl.pallas_call(
        kernel,
        out_shape=jax.ShapeDtypeStruct((B, c_pad), x.dtype),
        grid=(pl.cdiv(B, tb), pl.cdiv(S, ts)),
        in_specs=[
            pl.BlockSpec((tb, ts, D), lambda i, s: (i, s, 0)),    # streamed x
            pl.BlockSpec((D, c_pad), lambda i, s: (0, 0),
                         pipeline_mode=pl.Buffered(1)),           # resident W
            pl.BlockSpec((1, c_pad), lambda i, s: (0, 0),
                         pipeline_mode=pl.Buffered(1)),           # resident b
        ],
        out_specs=pl.BlockSpec((tb, c_pad), lambda i, s: (i, 0)),
        scratch_shapes=[pltpu.VMEM((tb, D), jnp.float32)],
        compiler_params=pltpu.CompilerParams(
            dimension_semantics=("parallel", "arbitrary"),
            vmem_limit_bytes=vmem_limit),
    )(x, w_p, b_p)
    return out[:, :C]


# ---------------------------------------------------------------------------
# Reference + tests
# ---------------------------------------------------------------------------
def _reference(x, w_t, b, method, cls_available):
    xf = x.astype(jnp.float32)
    if method == "cls_token":
        pooled = xf[:, 0]
    elif method == "avg":
        pooled = xf[:, 1:].mean(axis=1) if cls_available else xf.mean(axis=1)
    else:  # sum
        pooled = xf[:, 1:].sum(axis=1) if cls_available else xf.sum(axis=1)
    return pooled @ w_t.astype(jnp.float32) + b.astype(jnp.float32)


if __name__ == "__main__":
    key = jax.random.PRNGKey(0)
    B, S, D, C = 2, 8, 32, 10   # batch, seq (incl. cls), embed_dim, num_classes

    kx, kw, kb = jax.random.split(key, 3)
    x = jax.random.normal(kx, (B, S, D), dtype=jnp.float32)
    # torch nn.Linear weight convention is (C, D); store transposed as (D, C)
    w = jax.random.normal(kw, (C, D), dtype=jnp.float32) / jnp.sqrt(D)
    b = jax.random.normal(kb, (C,), dtype=jnp.float32) * 0.01
    w_t = w.T

    # 1) default config: avg pooling with a cls token
    out = jax.block_until_ready(classification_head(x, w_t, b))
    ref = _reference(x, w_t, b, "avg", True)
    assert out.shape == (B, C)
    assert jnp.allclose(out, ref, atol=1e-4, rtol=1e-4), "avg mismatch"

    # 2) sum pooling, no cls token
    out = jax.block_until_ready(
        classification_head(x, w_t, b, patch_aggregation_method="sum",
                            cls_token_available=False))
    ref = _reference(x, w_t, b, "sum", False)
    assert jnp.allclose(out, ref, atol=1e-4, rtol=1e-4), "sum mismatch"

    # 3) cls_token mode (only the CLS rows are read)
    out = jax.block_until_ready(
        classification_head(x, w_t, b, patch_aggregation_method="cls_token"))
    ref = _reference(x, w_t, b, "cls_token", True)
    assert jnp.allclose(out, ref, atol=1e-4, rtol=1e-4), "cls_token mismatch"

    # 4) long-sequence fallback: a tiny VMEM budget forces the S-split grid
    #    (tb=8, ts<S) plus a masked partial tail block.
    B2, S2, D2 = 16, 24, 128
    x2 = jax.random.normal(kx, (B2, S2, D2), dtype=jnp.float32)
    w2 = jax.random.normal(kw, (C, D2), dtype=jnp.float32) / jnp.sqrt(D2)
    out = jax.block_until_ready(
        classification_head(x2, w2.T, b, vmem_budget_bytes=256 << 10))
    ref = _reference(x2, w2.T, b, "avg", True)
    assert out.shape == (B2, C)
    assert jnp.allclose(out, ref, atol=1e-4, rtol=1e-4), "S-split mismatch"

    # 5) bf16 activations: weight kept resident in bf16, f32 pooled accumulation
    xb16 = x2.astype(jnp.bfloat16)
    outb = jax.block_until_ready(classification_head(xb16, w2.T, b))
    refb = _reference(xb16, w2.T, b, "avg", True)
    assert jnp.allclose(outb.astype(jnp.float32), refb, atol=5e-2, rtol=5e-2), \
        "bf16 mismatch"

    print("KERNEL_OK")
</pallas_src>

<mosaic_0001>
module attributes {stable_mosaic.version = 11 : i64} {
  func.func @_pool_fc_kernel(%arg0: i32, %arg1: i32, %arg2: memref<2x8x32xf32, #tpu.memory_space<vmem>>, %arg3: memref<32x128xf32, #tpu.memory_space<vmem>>, %arg4: memref<1x128xf32, #tpu.memory_space<vmem>>, %arg5: memref<2x128xf32, #tpu.memory_space<vmem>>, %arg6: memref<2x32xf32, #tpu.memory_space<vmem>>) attributes {dimension_semantics = [#tpu.dimension_semantics<parallel>, #tpu.dimension_semantics<arbitrary>], iteration_bounds = array<i64: 1, 1>, scalar_prefetch = 0 : i64, scratch_operands = 1 : i64, tpu.core_type = #tpu.core_type<tc>, window_params = [{transform_indices = @transform_0, window_bounds = array<i64: 2, 8, 32>}, {pipeline_mode = #tpu.pipeline_mode<synchronous>, transform_indices = @transform_1, window_bounds = array<i64: 32, 128>}, {pipeline_mode = #tpu.pipeline_mode<synchronous>, transform_indices = @transform_2, window_bounds = array<i64: 1, 128>}, {transform_indices = @transform_3, window_bounds = array<i64: 2, 128>}]} {
    %c0_i32 = arith.constant 0 : i32
    %0 = arith.cmpi eq, %arg1, %c0_i32 : i32
    %1 = arith.extui %0 : i1 to i32
    %c0_i32_0 = arith.constant 0 : i32
    %2 = arith.cmpi ne, %1, %c0_i32_0 : i32
    scf.if %2 {
      %cst_11 = arith.constant 0.000000e+00 : f32
      %14 = vector.broadcast %cst_11 : f32 to vector<2x32xf32>
      %c0_12 = arith.constant 0 : index
      %c0_13 = arith.constant 0 : index
      %15 = vector.load %arg6[%c0_12, %c0_13] : memref<2x32xf32, #tpu.memory_space<vmem>>, vector<2x32xf32>
      tpu.vector_store %arg6[%c0_12, %c0_13], %14 {strides = array<i32>} : memref<2x32xf32, #tpu.memory_space<vmem>>, vector<2x32xf32>,
    } else {
    }
    %c0 = arith.constant 0 : index
    %c0_1 = arith.constant 0 : index
    %c0_2 = arith.constant 0 : index
    %3 = vector.load %arg2[%c0, %c0_1, %c0_2] : memref<2x8x32xf32, #tpu.memory_space<vmem>>, vector<2x8x32xf32>
    %c0_3 = arith.constant 0 : index
    %c0_4 = arith.constant 0 : index
    %4 = vector.load %arg6[%c0_3, %c0_4] : memref<2x32xf32, #tpu.memory_space<vmem>>, vector<2x32xf32>
    %cst = arith.constant dense<0.000000e+00> : vector<2x32xf32>
    %5 = vector.multi_reduction <add>, %3, %cst [1] : vector<2x8x32xf32> to vector<2x32xf32>
    %6 = arith.addf %4, %5 : vector<2x32xf32>
    %c0_5 = arith.constant 0 : index
    %c0_6 = arith.constant 0 : index
    %7 = vector.load %arg6[%c0_5, %c0_6] : memref<2x32xf32, #tpu.memory_space<vmem>>, vector<2x32xf32>
    tpu.vector_store %arg6[%c0_5, %c0_6], %6 {strides = array<i32>} : memref<2x32xf32, #tpu.memory_space<vmem>>, vector<2x32xf32>,
    %c0_i32_7 = arith.constant 0 : i32
    %8 = arith.cmpi eq, %arg1, %c0_i32_7 : i32
    %9 = arith.extui %8 : i1 to i32
    %c0_i32_8 = arith.constant 0 : i32
    %10 = arith.cmpi ne, %9, %c0_i32_8 : i32
    scf.if %10 {
      %c0_11 = arith.constant 0 : index
      %c0_12 = arith.constant 0 : index
      %14 = vector.load %arg6[%c0_11, %c0_12] : memref<2x32xf32, #tpu.memory_space<vmem>>, vector<2x32xf32>
      %c0_13 = arith.constant 0 : index
      %c0_14 = arith.constant 0 : index
      %c0_15 = arith.constant 0 : index
      %15 = vector.load %arg2[%c0_13, %c0_14, %c0_15] : memref<2x8x32xf32, #tpu.memory_space<vmem>>, vector<2x1x32xf32>
      %16 = vector.shape_cast %15 : vector<2x1x32xf32> to vector<2x32xf32>
      %17 = arith.subf %14, %16 : vector<2x32xf32>
      %c0_16 = arith.constant 0 : index
      %c0_17 = arith.constant 0 : index
      %18 = vector.load %arg6[%c0_16, %c0_17] : memref<2x32xf32, #tpu.memory_space<vmem>>, vector<2x32xf32>
      tpu.vector_store %arg6[%c0_16, %c0_17], %17 {strides = array<i32>} : memref<2x32xf32, #tpu.memory_space<vmem>>, vector<2x32xf32>,
    } else {
    }
    %c0_i32_9 = arith.constant 0 : i32
    %11 = arith.cmpi eq, %arg1, %c0_i32_9 : i32
    %12 = arith.extui %11 : i1 to i32
    %c0_i32_10 = arith.constant 0 : i32
    %13 = arith.cmpi ne, %12, %c0_i32_10 : i32
    scf.if %13 {
      %c0_11 = arith.constant 0 : index
      %c0_12 = arith.constant 0 : index
      %14 = vector.load %arg6[%c0_11, %c0_12] : memref<2x32xf32, #tpu.memory_space<vmem>>, vector<2x32xf32>
      %cst_13 = arith.constant 0.142857149 : f32
      %15 = vector.broadcast %cst_13 : f32 to vector<2x32xf32>
      %16 = arith.mulf %14, %15 : vector<2x32xf32>
      %c0_14 = arith.constant 0 : index
      %c0_15 = arith.constant 0 : index
      %17 = vector.load %arg3[%c0_14, %c0_15] : memref<32x128xf32, #tpu.memory_space<vmem>>, vector<32x128xf32>
      %cst_16 = arith.constant dense<0.000000e+00> : vector<2x128xf32>
      %18 = tpu.matmul %16, %17, %cst_16 {dimension_numbers = #tpu.dot_dimension_numbers<[1], [0], [0], [1], [0, 0, 1, 1], [], []>} : vector<2x32xf32>, vector<32x128xf32>, vector<2x128xf32> -> vector<2x128xf32>
      %c0_17 = arith.constant 0 : index
      %c0_18 = arith.constant 0 : index
      %19 = vector.load %arg4[%c0_17, %c0_18] : memref<1x128xf32, #tpu.memory_space<vmem>>, vector<1x128xf32>
      %20 = vector.broadcast %19 : vector<1x128xf32> to vector<2x128xf32>
      %21 = arith.addf %18, %20 : vector<2x128xf32>
      %c0_19 = arith.constant 0 : index
      %c0_20 = arith.constant 0 : index
      %22 = vector.load %arg5[%c0_19, %c0_20] : memref<2x128xf32, #tpu.memory_space<vmem>>, vector<2x128xf32>
      tpu.vector_store %arg5[%c0_19, %c0_20], %21 {strides = array<i32>} : memref<2x128xf32, #tpu.memory_space<vmem>>, vector<2x128xf32>,
    } else {
    }
    return
  }
  func.func @transform_0(%arg0: i32, %arg1: i32) -> (i32, i32, i32) {
    %c0_i32 = arith.constant 0 : i32
    %c0_i32_0 = arith.constant 0 : i32
    return %arg0, %arg1, %c0_i32 : i32, i32, i32
  }
  func.func @transform_1(%arg0: i32, %arg1: i32) -> (i32, i32) {
    %c0_i32 = arith.constant 0 : i32
    %c0_i32_0 = arith.constant 0 : i32
    %c0_i32_1 = arith.constant 0 : i32
    return %c0_i32, %c0_i32_0 : i32, i32
  }
  func.func @transform_2(%arg0: i32, %arg1: i32) -> (i32, i32) {
    %c0_i32 = arith.constant 0 : i32
    %c0_i32_0 = arith.constant 0 : i32
    %c0_i32_1 = arith.constant 0 : i32
    return %c0_i32, %c0_i32_0 : i32, i32
  }
  func.func @transform_3(%arg0: i32, %arg1: i32) -> (i32, i32) {
    %c0_i32 = arith.constant 0 : i32
    %c0_i32_0 = arith.constant 0 : i32
    return %arg0, %c0_i32 : i32, i32
  }
}

</mosaic_0001>

<llo_original>
// kernel: tpu_custom_call.1
$region0: #{tpu_custom_call.1}
  #allocation0 [shape = 'u32[]', space=smem, size = 0x4, offset = 0x4, fixed_abs, tag = 'smem constant byte address 0x4 - core index']
  #allocation1 [shape = 'u32[144,128]{1,0:T(1,128)}', space=vmem, size = 0x12000, scoped, tag = 'internal scratch']
  #allocation2 [shape = 'f32[2,32]{1,0:T(2,128)}', space=vmem, size = 0x400, scoped, tag = 'scratch operand']
  %s0 = inlined_call_operand.hbm [shape: f32[2,8,32], index: 0, kind: input, shape index: {}]
  %s1 = inlined_call_operand.hbm [shape: f32[32,128], index: 1, kind: input, shape index: {}]
  %s2 = inlined_call_operand.vmem [shape: f32[1,128], index: 2, kind: input, shape index: {}]
  %s3 = inlined_call_operand.hbm [shape: f32[2,128], index: 3, kind: output, shape index: {}]
  %s4 = sld [smem:[#allocation0]]
  $region38: #{tpu_custom_call.1} parent=0
    _
  %s6 = ssub.s32 1, %s4
  %s7 = scalar_select 0, %s6, %s4
  $region1: #{tpu_custom_call.1} parent=0
    #allocation3 [shape = 'u8[8192]{0}', space=vmem, size = 0x2000, scoped, tag = 'input window, operand 0, single buffered']
    #allocation4 [shape = 's32[1]{0}', space=sflag, size = 0x4, scoped, tag = 'scoped memory for tpu_custom_call.1']
    #allocation5 [shape = 's32[1]{0}', space=sflag, size = 0x4, scoped, tag = 'scoped memory for tpu_custom_call.1']
    #allocation6 [shape = 'u8[16384]{0}', space=vmem, size = 0x4000, scoped, tag = 'input window, operand 1, single buffered']
    #allocation7 [shape = 's32[1]{0}', space=sflag, size = 0x4, scoped, tag = 'scoped memory for tpu_custom_call.1']
    #allocation8 [shape = 'u8[1024]{0}', space=vmem, size = 0x400, scoped, tag = 'output window, operand 0, single buffered']
    %8 = vsyncpa [#allocation4], 0
    %9 = vsyncpa [#allocation7], 0
    %10 = vsyncpa [#allocation5], 0
    // Predicated region
    $region2: #{tpu_custom_call.1} parent=1 // pred_check
      _
    $region3: #{tpu_custom_call.1} parent=1 // pred_check_branch
      %12 = sbr.rel (0) target = $region5
    $region4: #{tpu_custom_call.1} parent=1 // pred_region
      %s14 = ssub.s32 256, 256
      %15 = vsyncadd [#allocation4], %s14
      %s16 = sshll.u32 [#allocation3], 4
      %s17 = int_to_ptr.vmem [resolvable:$true] %s16
      %22 = dma.hbm_to_vmem [thread:$0]  %s0, 256, %s17, [#allocation4], 128, 128, 8
    $region5: #{tpu_custom_call.1} parent=1 // pred_fallthru
      _
    // Predicated region
    $region6: #{tpu_custom_call.1} parent=1 // pred_check
      _
    $region7: #{tpu_custom_call.1} parent=1 // pred_check_branch
      %24 = sbr.rel (0) target = $region9
    $region8: #{tpu_custom_call.1} parent=1 // pred_region
      %s26 = ssub.s32 512, 512
      %27 = vsyncadd [#allocation7], %s26
      %s28 = sshll.u32 [#allocation6], 4
      %s29 = int_to_ptr.vmem [resolvable:$true] %s28
      %34 = dma.hbm_to_vmem [thread:$0]  %s1, 512, %s29, [#allocation7], 128, 128, 8
    $region9: #{tpu_custom_call.1} parent=1 // pred_fallthru
      _
    // Predicated region
    $region10: #{tpu_custom_call.1} parent=1 // pred_check
      _
    $region11: #{tpu_custom_call.1} parent=1 // pred_check_branch
      %36 = sbr.rel (0) target = $region13
    $region12: #{tpu_custom_call.1} parent=1 // pred_region
      _
    $region13: #{tpu_custom_call.1} parent=1 // pred_fallthru
      _
    // Predicated region
    $region14: #{tpu_custom_call.1} parent=1 // pred_check
      _
    $region15: #{tpu_custom_call.1} parent=1 // pred_check_branch
      %38 = sbr.rel (0) target = $region17
    $region16: #{tpu_custom_call.1} parent=1 // pred_region
      %39 = dma.done [#allocation4], 256
    $region17: #{tpu_custom_call.1} parent=1 // pred_fallthru
      _
    // Predicated region
    $region18: #{tpu_custom_call.1} parent=1 // pred_check
      _
    $region19: #{tpu_custom_call.1} parent=1 // pred_check_branch
      %41 = sbr.rel (0) target = $region21
    $region20: #{tpu_custom_call.1} parent=1 // pred_region
      %42 = dma.done [#allocation7], 512
    $region21: #{tpu_custom_call.1} parent=1 // pred_fallthru
      _
    %p43 = scmp.eq.s32.totalorder 0, 0
    // Predicated region
    $region22: #{tpu_custom_call.1} parent=1 // pred_check
      %p44 = pneg %p43
    $region23: #{tpu_custom_call.1} parent=1 // pred_check_branch
      %46 = sbr.rel (%p44) target = $region25
    $region24: #{tpu_custom_call.1} parent=1 // pred_region
      %vm47 = vcmask 254976
      %48 = vst.msk [vmem:[#allocation2] sm:$0x3] %vm47, 0.0
    $region25: #{tpu_custom_call.1} parent=1 // pred_fallthru
      _
    %v49 = vld [vmem:[#allocation3] sm:$0xff]
    %v50 = vld [vmem:[#allocation3 + $0x8] sm:$0xff]
    %v51 = vld [vmem:[#allocation2] sm:$0x3]
    %vm52 = vcmask 261120
    %v53 = vsel %vm52, %v49, 0.0
    %v54 = vrot.slane %v53, 4
    %v55 = vadd.f32 %v53, %v54
    %v56 = vrot.slane %v55, 2
    %v57 = vadd.f32 %v55, %v56
    %v58 = vrot.slane %v57, 1
    %v59 = vadd.f32 %v57, %v58
    %v60 = vsel %vm52, %v50, 0.0
    %v61 = vrot.slane %v60, 4
    %v62 = vadd.f32 %v60, %v61
    %v63 = vrot.slane %v62, 2
    %v64 = vadd.f32 %v62, %v63
    %v65 = vrot.slane %v64, 1
    %v66 = vadd.f32 %v64, %v65
    %vm69 = vcmask 1041409
    %v70 = vsel %vm69, %v66, %v59
    %v72 = vadd.f32 %v51, %v70
    %vm73 = vcmask 254976
    %74 = vst.msk [vmem:[#allocation2] sm:$0x3] %vm73, %v72
    // Predicated region
    $region26: #{tpu_custom_call.1} parent=1 // pred_check
      %p75 = pneg %p43
    $region27: #{tpu_custom_call.1} parent=1 // pred_check_branch
      %77 = sbr.rel (%p75) target = $region29
    $region28: #{tpu_custom_call.1} parent=1 // pred_region
      %v78 = vld [vmem:[#allocation2] sm:$0x3]
      %v79 = vld [vmem:[#allocation3] sm:$0x1]
      %v80 = vld [vmem:[#allocation3 + $0x8] sm:$0x1]
      %v83 = vrot.slane %v80, 7
      %v84 = vsel %vm69, %v83, %v79
      %v86 = vsub.f32 %v78, %v84
      %87 = vst.msk [vmem:[#allocation2] sm:$0x3] %vm73, %v86
      %v88 = vld [vmem:[#allocation2] sm:$0x3]
      %v89 = vmul.f32 %v88, 0.14285715
      %v90 = vld [vmem:[#allocation6] sm:$0xff]
      %v91 = vld [vmem:[#allocation6 + $0x8] sm:$0xff]
      %v92 = vld [vmem:[#allocation6 + $0x10] sm:$0xff]
      %v93 = vld [vmem:[#allocation6 + $0x18] sm:$0xff]
      %v94 = vld [vmem:[%s2] sm:$0x1]
      %v96 = vlaneseq
      %v97 = vshrl.u32 %v96, 7
      %v98 = vsub.s32 0, %v97
      %v99 = vrot.slane %v94, %v98
      %v102 = vsel %vm52, %v89, 0
      %104 = vmatprep.subr.mxu0 0.0
      %105 = vmatpush1.msra.mxu0 0.0
      %106 = vmatprep.subr.mxu0 0.0
      %107 = vmatpush1.msra.mxu0 0.0
      %108 = vmatprep.subr.mxu0 0.0
      %109 = vmatpush1.msra.mxu0 0.0
      %110 = vmatprep.subr.mxu0 0.0
      %111 = vmatpush1.msra.mxu0 0.0
      %112 = vmatprep.subr.mxu0 0.0
      %113 = vmatpush1.msra.mxu0 0.0
      %114 = vmatprep.subr.mxu0 0.0
      %115 = vmatpush1.msra.mxu0 0.0
      %116 = vmatprep.subr.mxu0 0.0
      %117 = vmatpush1.msra.mxu0 0.0
      %118 = vmatprep.subr.mxu0 0.0
      %119 = vmatpush1.msra.mxu0 0.0
      %120 = vmatprep.subr.mxu0 0.0
      %121 = vmatpush1.msra.mxu0 0.0
      %122 = vmatprep.subr.mxu0 0.0
      %123 = vmatpush1.msra.mxu0 0.0
      %124 = vmatprep.subr.mxu0 0.0
      %125 = vmatpush1.msra.mxu0 0.0
      %126 = vmatprep.subr.mxu0 0.0
      %127 = vmatpush1.msra.mxu0 0.0
      %128 = vmatprep.subr.mxu0 0.0
      %129 = vmatpush1.msra.mxu0 %v93
      %130 = vmatprep.subr.mxu0 0.0
      %131 = vmatpush1.msra.mxu0 %v92
      %132 = vmatprep.subr.mxu0 0.0
      %133 = vmatpush1.msra.mxu0 %v91
      %134 = vmatprep.subr.mxu0 0.0
      %135 = vmatpush1.msra.mxu0 %v90
      %136 = vmatprep.subr.mxu0 0.0
      %137 = vmatpush2.msra.mxu0 0.0
      %138 = vmatprep.subr.mxu0 0.0
      %139 = vmatpush2.msra.mxu0 0.0
      %140 = vmatprep.subr.mxu0 0.0
      %141 = vmatpush2.msra.mxu0 0.0
      %142 = vmatprep.subr.mxu0 0.0
      %143 = vmatpush2.msra.mxu0 0.0
      %144 = vmatprep.subr.mxu0 0.0
      %145 = vmatpush2.msra.mxu0 0.0
      %146 = vmatprep.subr.mxu0 0.0
      %147 = vmatpush2.msra.mxu0 0.0
      %148 = vmatprep.subr.mxu0 0.0
      %149 = vmatpush2.msra.mxu0 0.0
      %150 = vmatprep.subr.mxu0 0.0
      %151 = vmatpush2.msra.mxu0 0.0
      %152 = vmatprep.subr.mxu0 0.0
      %153 = vmatpush2.msra.mxu0 0.0
      %154 = vmatprep.subr.mxu0 0.0
      %155 = vmatpush2.msra.mxu0 0.0
      %156 = vmatprep.subr.mxu0 0.0
      %157 = vmatpush2.msra.mxu0 0.0
      %158 = vmatprep.subr.mxu0 0.0
      %159 = vmatpush2.msra.mxu0 0.0
      %160 = vmatprep.subr.mxu0 0.0
      %161 = vmatpush2.msra.mxu0 0.0
      %162 = vmatprep.subr.mxu0 0.0
      %163 = vmatpush2.msra.mxu0 0.0
      %164 = vmatprep.subr.mxu0 0.0
      %165 = vmatpush2.msra.mxu0 0.0
      %166 = vmatprep.subr.mxu0 0.0
      %167 = vmatpush2.msra.mxu0 0.0
      %168 = vmatprep.mubr.f32.mxu0 0.0
      %169 = vmatmul.mubr.f32.gmra.mxu0 %v102
      %v170 = vpop.f32.mrf.mxu0
      %v171 = vadd.f32 %v99, %v170
      %v172 = vpop.f32.mrf.mxu0
      %173 = vdwg.mxu0
      %174 = vst [vmem:[#allocation8] sm:$0x3] %v171
    $region29: #{tpu_custom_call.1} parent=1 // pred_fallthru
      _
    // Predicated region
    $region30: #{tpu_custom_call.1} parent=1 // pred_check
      _
    $region31: #{tpu_custom_call.1} parent=1 // pred_check_branch
      %176 = sbr.rel (0) target = $region33
    $region32: #{tpu_custom_call.1} parent=1 // pred_region
      %s178 = ssub.s32 32, 32
      %179 = vsyncadd [#allocation5], %s178
      %s181 = sshll.u32 [#allocation8], 4
      %s182 = int_to_ptr.vmem [resolvable:$true] %s181
      %184 = dma.vmem_to_hbm [thread:$0]  %s182, 32, %s3, [#allocation5]
    $region33: #{tpu_custom_call.1} parent=1 // pred_fallthru
      _
    // Predicated region
    $region34: #{tpu_custom_call.1} parent=1 // pred_check
      _
    $region35: #{tpu_custom_call.1} parent=1 // pred_check_branch
      %186 = sbr.rel (0) target = $region37
    $region36: #{tpu_custom_call.1} parent=1 // pred_region
      %187 = dma.done [#allocation5], 32
    $region37: #{tpu_custom_call.1} parent=1 // pred_fallthru
      _
    %188 = vsyncpa [#allocation4], 1
    %189 = vsyncpa [#allocation7], 1
    %190 = vsyncpa [#allocation5], 1

</llo_original>
